<compile_context>
chip_gen: v5e
topology: v5e:2x2
jax: 0.10.0
libtpu: 0.0.40
codegen_flags: <defaults>
</compile_context>

<pallas_src>
import functools

import jax
import jax.numpy as jnp
from jax.experimental import pallas as pl
from jax.experimental.pallas import tpu as pltpu


def _round_up(x: int, m: int) -> int:
    return ((x + m - 1) // m) * m


def _nbytes(a) -> int:
    return int(a.size) * jnp.dtype(a.dtype).itemsize


def _policy_kernel(x_ref, w1_ref, b1_ref, w2_ref, b2_ref, o_ref,
                   *, action_bound: float):
    # fc1: MXU matmul with f32 accumulation; bias add + ReLU on the VPU (f32).
    h = jnp.dot(x_ref[...], w1_ref[...], preferred_element_type=jnp.float32)
    h = jnp.maximum(h + b1_ref[...], 0.0)

    # fc2: tiny (hidden, act) weight; any dtype promotion happens here in
    # VMEM, never as a separate wrapper-side HBM pass.
    a = jnp.dot(h, w2_ref[...], preferred_element_type=jnp.float32)
    a = a + b2_ref[...]

    # tanh rides the EUP, scale on the VPU; store the narrow action block.
    o_ref[...] = (jnp.tanh(a) * action_bound).astype(o_ref.dtype)


def policy_net_forward(x, w1, b1, w2, b2, action_bound: float = 1.0,
                       *, block_batch: int = 8192):
    """PolicyNet forward pass as a single batch-tiled Pallas kernel.

    x:  (B, obs_dim)            f32 or bf16 (producer-supplied dtype)
    w1: (obs_dim, hidden_dim)
    b1: (1, hidden_dim)
    w2: (hidden_dim, act_dim)
    b2: (1, act_dim)
    returns (B, act_dim) in x.dtype
    """
    batch, obs_dim = x.shape
    hidden_dim, act_dim = w2.shape
    out_dtype = x.dtype

    # ---- batch tile size ----------------------------------------------------
    # Multiple of 8 sublanes, >=2 tiles when possible (v7x megacore), capped.
    block_batch = max(8, _round_up(block_batch, 8))
    if batch <= 8:
        tb = batch  # full-extent block along batch; always a legal block dim
    else:
        tb = min(block_batch, _round_up(pl.cdiv(batch, 2), 8))
    grid = (pl.cdiv(batch, tb),)

    # ---- cost / VMEM bookkeeping ---------------------------------------------
    flops = 2 * batch * (obs_dim * hidden_dim + hidden_dim * act_dim)
    transcendentals = batch * act_dim  # tanh
    bytes_accessed = int(
        _nbytes(x) + _nbytes(w1) + _nbytes(b1) + _nbytes(w2) + _nbytes(b2)
        + batch * act_dim * jnp.dtype(out_dtype).itemsize)

    # Double-buffered x / out tiles + resident weights + fc1 activation temp.
    vmem_bytes = (2 * tb * obs_dim * jnp.dtype(x.dtype).itemsize
                  + 2 * tb * act_dim * jnp.dtype(out_dtype).itemsize
                  + tb * hidden_dim * 4
                  + _nbytes(w1) + _nbytes(b1) + _nbytes(w2) + _nbytes(b2))
    compiler_kwargs = dict(dimension_semantics=("parallel",))
    if vmem_bytes > 12 * 1024 * 1024:
        # v5e's default scoped VMEM is 16 MiB; raise it for very large tiles
        # (physical VMEM: 128 MiB on v5e/v6e, 64 MiB per core on v7x).
        compiler_kwargs["vmem_limit_bytes"] = int(
            min(vmem_bytes + (4 << 20), 48 << 20))

    kernel = functools.partial(_policy_kernel, action_bound=float(action_bound))

    return pl.pallas_call(
        kernel,
        out_shape=jax.ShapeDtypeStruct((batch, act_dim), out_dtype),
        grid=grid,
        in_specs=[
            # Activations: one batch tile per grid step.  Ragged last tile is
            # handled by Pallas (clipped edge DMA; OOB output rows dropped),
            # so no wrapper-side jnp.pad / extra HBM copy of x.
            pl.BlockSpec((tb, obs_dim), lambda i: (i, 0)),
            # Weights / biases: constant index_map -> DMA'd once, VMEM-resident
            # across all batch tiles.
            pl.BlockSpec((obs_dim, hidden_dim), lambda i: (0, 0)),
            pl.BlockSpec((1, hidden_dim), lambda i: (0, 0)),
            pl.BlockSpec((hidden_dim, act_dim), lambda i: (0, 0)),
            pl.BlockSpec((1, act_dim), lambda i: (0, 0)),
        ],
        out_specs=pl.BlockSpec((tb, act_dim), lambda i: (i, 0)),
        compiler_params=pltpu.CompilerParams(**compiler_kwargs),
        cost_estimate=pl.CostEstimate(
            flops=flops,
            transcendentals=transcendentals,
            bytes_accessed=bytes_accessed),
    )(x, w1, b1, w2, b2)


def init_params(key, obs_dim, hidden_dim, action_dim, init_w=0.003):
    """Parameter init mirroring the PyTorch module.

    fc1: torch default init (uniform(-1/sqrt(fan_in), 1/sqrt(fan_in)))
    fc2: uniform(-init_w, init_w)   (as in the module's __init__)
    """
    k1, k2, k3, k4 = jax.random.split(key, 4)
    bound1 = 1.0 / jnp.sqrt(obs_dim)
    w1 = jax.random.uniform(k1, (obs_dim, hidden_dim),
                            minval=-bound1, maxval=bound1, dtype=jnp.float32)
    b1 = jax.random.uniform(k2, (1, hidden_dim),
                            minval=-bound1, maxval=bound1, dtype=jnp.float32)
    w2 = jax.random.uniform(k3, (hidden_dim, action_dim),
                            minval=-init_w, maxval=init_w, dtype=jnp.float32)
    b2 = jax.random.uniform(k4, (1, action_dim),
                            minval=-init_w, maxval=init_w, dtype=jnp.float32)
    return w1, b1, w2, b2


def _reference(x, w1, b1, w2, b2, action_bound):
    return jnp.tanh(jnp.maximum(x @ w1 + b1, 0.0) @ w2 + b2) * action_bound


if __name__ == "__main__":
    # Small shapes consistent with the module: obs_dim=16, hidden=32, actions=4
    obs_dim, hidden_dim, action_dim = 16, 32, 4
    action_bound = 2.0

    key = jax.random.PRNGKey(0)
    kx, kp, kx2 = jax.random.split(key, 3)
    w1, b1, w2, b2 = init_params(kp, obs_dim, hidden_dim, action_dim)

    # --- small batch, f32, single full-extent tile ---------------------------
    batch = 8
    x = jax.random.normal(kx, (batch, obs_dim), dtype=jnp.float32)
    out = jax.block_until_ready(
        policy_net_forward(x, w1, b1, w2, b2, action_bound=action_bound))
    ref = _reference(x, w1, b1, w2, b2, action_bound)
    assert out.shape == (batch, action_dim)
    assert jnp.allclose(out, ref, atol=1e-5, rtol=1e-5), "f32 mismatch vs reference"

    # --- larger batch not divisible by the tile: exercises the 2-tile grid and
    #     the ragged last block (clipped edge DMA, masked OOB output rows). ----
    batch2 = 1000
    x2 = jax.random.normal(kx2, (batch2, obs_dim), dtype=jnp.float32)
    out2 = jax.block_until_ready(
        policy_net_forward(x2, w1, b1, w2, b2, action_bound=action_bound))
    ref2 = _reference(x2, w1, b1, w2, b2, action_bound)
    assert out2.shape == (batch2, action_dim)
    assert jnp.allclose(out2, ref2, atol=1e-5, rtol=1e-5), "grid-path mismatch vs reference"

    # --- producer-supplied bf16 activations & weights (no wrapper-side cast):
    #     bf16 MXU inputs, f32 accumulation, bf16 store (halves in/out traffic).
    x2_bf16 = x2.astype(jnp.bfloat16)
    w1_bf16 = w1.astype(jnp.bfloat16)
    w2_bf16 = w2.astype(jnp.bfloat16)
    out_bf16 = jax.block_until_ready(
        policy_net_forward(x2_bf16, w1_bf16, b1, w2_bf16, b2,
                           action_bound=action_bound))
    assert out_bf16.shape == (batch2, action_dim)
    assert out_bf16.dtype == jnp.bfloat16
    assert jnp.allclose(out_bf16.astype(jnp.float32), ref2,
                        atol=3e-2, rtol=3e-2), "bf16 mismatch vs reference"

    print("KERNEL_OK")
</pallas_src>

<mosaic_0001>
module attributes {stable_mosaic.version = 11 : i64} {
  func.func @_policy_kernel(%arg0: i32, %arg1: memref<8x16xf32, #tpu.memory_space<vmem>>, %arg2: memref<16x32xf32, #tpu.memory_space<vmem>>, %arg3: memref<1x32xf32, #tpu.memory_space<vmem>>, %arg4: memref<32x4xf32, #tpu.memory_space<vmem>>, %arg5: memref<1x4xf32, #tpu.memory_space<vmem>>, %arg6: memref<8x4xf32, #tpu.memory_space<vmem>>) attributes {dimension_semantics = [#tpu.dimension_semantics<parallel>], iteration_bounds = array<i64: 1>, scalar_prefetch = 0 : i64, scratch_operands = 0 : i64, tpu.core_type = #tpu.core_type<tc>, window_params = [{transform_indices = @transform_0, window_bounds = array<i64: 8, 16>}, {pipeline_mode = #tpu.pipeline_mode<synchronous>, transform_indices = @transform_1, window_bounds = array<i64: 16, 32>}, {pipeline_mode = #tpu.pipeline_mode<synchronous>, transform_indices = @transform_2, window_bounds = array<i64: 1, 32>}, {pipeline_mode = #tpu.pipeline_mode<synchronous>, transform_indices = @transform_3, window_bounds = array<i64: 32, 4>}, {pipeline_mode = #tpu.pipeline_mode<synchronous>, transform_indices = @transform_4, window_bounds = array<i64: 1, 4>}, {transform_indices = @transform_5, window_bounds = array<i64: 8, 4>}]} {
    %c0 = arith.constant 0 : index
    %c0_0 = arith.constant 0 : index
    %0 = vector.load %arg1[%c0, %c0_0] : memref<8x16xf32, #tpu.memory_space<vmem>>, vector<8x16xf32>
    %c0_1 = arith.constant 0 : index
    %c0_2 = arith.constant 0 : index
    %1 = vector.load %arg2[%c0_1, %c0_2] : memref<16x32xf32, #tpu.memory_space<vmem>>, vector<16x32xf32>
    %cst = arith.constant dense<0.000000e+00> : vector<8x32xf32>
    %2 = tpu.matmul %0, %1, %cst {dimension_numbers = #tpu.dot_dimension_numbers<[1], [0], [0], [1], [0, 0, 1, 1], [], []>} : vector<8x16xf32>, vector<16x32xf32>, vector<8x32xf32> -> vector<8x32xf32>
    %c0_3 = arith.constant 0 : index
    %c0_4 = arith.constant 0 : index
    %3 = vector.load %arg3[%c0_3, %c0_4] : memref<1x32xf32, #tpu.memory_space<vmem>>, vector<1x32xf32>
    %4 = vector.broadcast %3 : vector<1x32xf32> to vector<8x32xf32>
    %5 = arith.addf %2, %4 : vector<8x32xf32>
    %cst_5 = arith.constant 0.000000e+00 : f32
    %6 = vector.broadcast %cst_5 : f32 to vector<8x32xf32>
    %7 = arith.maximumf %5, %6 : vector<8x32xf32>
    %c0_6 = arith.constant 0 : index
    %c0_7 = arith.constant 0 : index
    %8 = vector.load %arg4[%c0_6, %c0_7] : memref<32x4xf32, #tpu.memory_space<vmem>>, vector<32x4xf32>
    %cst_8 = arith.constant dense<0.000000e+00> : vector<8x4xf32>
    %9 = tpu.matmul %7, %8, %cst_8 {dimension_numbers = #tpu.dot_dimension_numbers<[1], [0], [0], [1], [0, 0, 1, 1], [], []>} : vector<8x32xf32>, vector<32x4xf32>, vector<8x4xf32> -> vector<8x4xf32>
    %c0_9 = arith.constant 0 : index
    %c0_10 = arith.constant 0 : index
    %10 = vector.load %arg5[%c0_9, %c0_10] : memref<1x4xf32, #tpu.memory_space<vmem>>, vector<1x4xf32>
    %11 = vector.broadcast %10 : vector<1x4xf32> to vector<8x4xf32>
    %12 = arith.addf %9, %11 : vector<8x4xf32>
    %13 = math.tanh %12 : vector<8x4xf32>
    %cst_11 = arith.constant 2.000000e+00 : f32
    %14 = vector.broadcast %cst_11 : f32 to vector<8x4xf32>
    %15 = arith.mulf %13, %14 : vector<8x4xf32>
    %c0_12 = arith.constant 0 : index
    %c0_13 = arith.constant 0 : index
    %16 = vector.load %arg6[%c0_12, %c0_13] : memref<8x4xf32, #tpu.memory_space<vmem>>, vector<8x4xf32>
    tpu.vector_store %arg6[%c0_12, %c0_13], %15 {strides = array<i32>} : memref<8x4xf32, #tpu.memory_space<vmem>>, vector<8x4xf32>,
    return
  }
  func.func @transform_0(%arg0: i32) -> (i32, i32) {
    %c0_i32 = arith.constant 0 : i32
    %c0_i32_0 = arith.constant 0 : i32
    return %arg0, %c0_i32 : i32, i32
  }
  func.func @transform_1(%arg0: i32) -> (i32, i32) {
    %c0_i32 = arith.constant 0 : i32
    %c0_i32_0 = arith.constant 0 : i32
    %c0_i32_1 = arith.constant 0 : i32
    return %c0_i32, %c0_i32_0 : i32, i32
  }
  func.func @transform_2(%arg0: i32) -> (i32, i32) {
    %c0_i32 = arith.constant 0 : i32
    %c0_i32_0 = arith.constant 0 : i32
    %c0_i32_1 = arith.constant 0 : i32
    return %c0_i32, %c0_i32_0 : i32, i32
  }
  func.func @transform_3(%arg0: i32) -> (i32, i32) {
    %c0_i32 = arith.constant 0 : i32
    %c0_i32_0 = arith.constant 0 : i32
    %c0_i32_1 = arith.constant 0 : i32
    return %c0_i32, %c0_i32_0 : i32, i32
  }
  func.func @transform_4(%arg0: i32) -> (i32, i32) {
    %c0_i32 = arith.constant 0 : i32
    %c0_i32_0 = arith.constant 0 : i32
    %c0_i32_1 = arith.constant 0 : i32
    return %c0_i32, %c0_i32_0 : i32, i32
  }
  func.func @transform_5(%arg0: i32) -> (i32, i32) {
    %c0_i32 = arith.constant 0 : i32
    %c0_i32_0 = arith.constant 0 : i32
    return %arg0, %c0_i32 : i32, i32
  }
}

</mosaic_0001>

<llo_original>
// kernel: tpu_custom_call.1
$region0: #{tpu_custom_call.1}
  #allocation0 [shape = 'u32[]', space=smem, size = 0x4, offset = 0x4, fixed_abs, tag = 'smem constant byte address 0x4 - core index']
  #allocation1 [shape = 'u32[72,128]{1,0:T(1,128)}', space=vmem, size = 0x9000, scoped, tag = 'internal scratch']
  %s0 = inlined_call_operand.vmem [shape: f32[8,16], index: 0, kind: input, shape index: {}]
  %s1 = inlined_call_operand.vmem [shape: f32[16,32], index: 1, kind: input, shape index: {}]
  %s2 = inlined_call_operand.vmem [shape: f32[1,32], index: 2, kind: input, shape index: {}]
  %s3 = inlined_call_operand.vmem [shape: f32[32,4], index: 3, kind: input, shape index: {}]
  %s4 = inlined_call_operand.vmem [shape: f32[1,4], index: 4, kind: input, shape index: {}]
  %s5 = inlined_call_operand.vmem [shape: f32[8,4], index: 5, kind: output, shape index: {}]
  %s6 = sld [smem:[#allocation0]]
  $region30: #{tpu_custom_call.1} parent=0
    _
  %s8 = ssub.s32 1, %s6
  %s9 = scalar_select 0, %s8, %s6
  // Predicated region
  $region2: #{tpu_custom_call.1} parent=0 // pred_check
    _
  $region3: #{tpu_custom_call.1} parent=0 // pred_check_branch
    %11 = sbr.rel (0) target = $region5
  $region4: #{tpu_custom_call.1} parent=0 // pred_region
    _
  $region5: #{tpu_custom_call.1} parent=0 // pred_fallthru
    _
  // Predicated region
  $region6: #{tpu_custom_call.1} parent=0 // pred_check
    _
  $region7: #{tpu_custom_call.1} parent=0 // pred_check_branch
    %13 = sbr.rel (0) target = $region9
  $region8: #{tpu_custom_call.1} parent=0 // pred_region
    _
  $region9: #{tpu_custom_call.1} parent=0 // pred_fallthru
    _
  // Predicated region
  $region10: #{tpu_custom_call.1} parent=0 // pred_check
    _
  $region11: #{tpu_custom_call.1} parent=0 // pred_check_branch
    %15 = sbr.rel (0) target = $region13
  $region12: #{tpu_custom_call.1} parent=0 // pred_region
    _
  $region13: #{tpu_custom_call.1} parent=0 // pred_fallthru
    _
  // Predicated region
  $region14: #{tpu_custom_call.1} parent=0 // pred_check
    _
  $region15: #{tpu_custom_call.1} parent=0 // pred_check_branch
    %17 = sbr.rel (0) target = $region17
  $region16: #{tpu_custom_call.1} parent=0 // pred_region
    _
  $region17: #{tpu_custom_call.1} parent=0 // pred_fallthru
    _
  // Predicated region
  $region18: #{tpu_custom_call.1} parent=0 // pred_check
    _
  $region19: #{tpu_custom_call.1} parent=0 // pred_check_branch
    %19 = sbr.rel (0) target = $region21
  $region20: #{tpu_custom_call.1} parent=0 // pred_region
    _
  $region21: #{tpu_custom_call.1} parent=0 // pred_fallthru
    _
  %v20 = vld [vmem:[%s0] sm:$0xff]
  %v21 = vld [vmem:[%s1] sm:$0xff]
  %v22 = vld [vmem:[%s1 + $0x8] sm:$0xff]
  %v23 = vld [vmem:[%s2] sm:$0x1]
  %v25 = vperm.slane %v23, 0
  %vm27 = vcmask 130048
  %v29 = vsel %vm27, %v20, 0
  %31 = vmatpush.msra.mxu0 0.0
  %32 = vmatpush.msra.mxu0 0.0
  %33 = vmatpush.msra.mxu0 0.0
  %34 = vmatpush.msra.mxu0 0.0
  %35 = vmatpush.msra.mxu0 0.0
  %36 = vmatpush.msra.mxu0 0.0
  %37 = vmatpush.msra.mxu0 0.0
  %38 = vmatpush.msra.mxu0 0.0
  %39 = vmatpush.msra.mxu0 0.0
  %40 = vmatpush.msra.mxu0 0.0
  %41 = vmatpush.msra.mxu0 0.0
  %42 = vmatpush.msra.mxu0 0.0
  %43 = vmatpush.msra.mxu0 0.0
  %44 = vmatpush.msra.mxu0 0.0
  %45 = vmatpush.msra.mxu0 %v22
  %46 = vmatpush.msra.mxu0 %v21
  %47 = vmatmul.f32.gmra.mxu0 %v29
  %v48 = vpop.f32.mrf.mxu0
  %v49 = vadd.f32 %v25, %v48
  %50 = vdwg.mxu0
  %v51 = vmax.f32 %v49, 0.0
  %v52 = vld [vmem:[%s3] sm:$0xff]
  %v53 = vld [vmem:[%s3 + $0x8] sm:$0xff]
  %v54 = vld [vmem:[%s3 + $0x10] sm:$0xff]
  %v55 = vld [vmem:[%s3 + $0x18] sm:$0xff]
  %v56 = vld [vmem:[%s4] sm:$0x1]
  %v58 = vperm.slane %v56, 0
  %vm60 = vcmask 261120
  %v62 = vsel %vm60, %v51, 0
  %64 = vmatpush.msra.mxu0 0.0
  %65 = vmatpush.msra.mxu0 0.0
  %66 = vmatpush.msra.mxu0 0.0
  %67 = vmatpush.msra.mxu0 0.0
  %68 = vmatpush.msra.mxu0 0.0
  %69 = vmatpush.msra.mxu0 0.0
  %70 = vmatpush.msra.mxu0 0.0
  %71 = vmatpush.msra.mxu0 0.0
  %72 = vmatpush.msra.mxu0 0.0
  %73 = vmatpush.msra.mxu0 0.0
  %74 = vmatpush.msra.mxu0 0.0
  %75 = vmatpush.msra.mxu0 0.0
  %76 = vmatpush.msra.mxu0 %v55
  %77 = vmatpush.msra.mxu0 %v54
  %78 = vmatpush.msra.mxu0 %v53
  %79 = vmatpush.msra.mxu0 %v52
  %80 = vmatmul.f32.gmra.mxu0 %v62
  %v81 = vpop.f32.mrf.mxu0
  %v82 = vadd.f32 %v58, %v81
  %83 = vdwg.mxu0
  %v84 = vtanh.pop %v82
  %v85 = vmul.f32 %v84, 2.0
  %vm86 = vcmask 31744
  %87 = vst.msk [vmem:[%s5] sm:$0xff] %vm86, %v85
  // Predicated region
  $region22: #{tpu_custom_call.1} parent=0 // pred_check
    _
  $region23: #{tpu_custom_call.1} parent=0 // pred_check_branch
    %89 = sbr.rel (0) target = $region25
  $region24: #{tpu_custom_call.1} parent=0 // pred_region
    _
  $region25: #{tpu_custom_call.1} parent=0 // pred_fallthru
    _
  // Predicated region
  $region26: #{tpu_custom_call.1} parent=0 // pred_check
    _
  $region27: #{tpu_custom_call.1} parent=0 // pred_check_branch
    %91 = sbr.rel (0) target = $region29
  $region28: #{tpu_custom_call.1} parent=0 // pred_region
    _
  $region29: #{tpu_custom_call.1} parent=0 // pred_fallthru
    _

</llo_original>
